<compile_context>
chip_gen: v5e
topology: v5e:2x2
jax: 0.10.0
libtpu: 0.0.40
codegen_flags: <defaults>
</compile_context>

<pallas_src>
import functools

import jax
import jax.numpy as jnp
from jax.experimental import pallas as pl
from jax.experimental.pallas import tpu as pltpu


def _tpu_params():
    """Returns (tile_budget_bytes, vmem_ceiling_bytes, split_batch_for_megacore)."""
    kind = ""
    try:
        kind = jax.devices()[0].device_kind.lower()
    except Exception:
        pass
    vmem_cap = 128 << 20
    try:
        vmem_cap = int(pltpu.get_tpu_info().vmem_capacity_bytes)
    except Exception:
        pass
    if "v7" in kind or vmem_cap <= (80 << 20):
        # v7x-class: 64 MiB VMEM / TC, ~3.2 TB/s HBM, 2 TensorCores per chip.
        return 12 << 20, max(40 << 20, vmem_cap - (16 << 20)), True
    if "v6" in kind:
        # v6e: 128 MiB VMEM, ~1.4 TB/s HBM.
        return 8 << 20, 96 << 20, False
    # v5e / unknown: slower HBM, smaller tiles already hide step overhead.
    return 5 << 20, 64 << 20, False


def channel_attention_kernel(x_ref, w1t_ref, w2t_ref, o_ref,
                             sum_acc, max_acc, *, hw):
    # x_ref:   (bt, C, THW)  spatial tile of bt batch rows (native dtype)
    # w1t_ref: (C, Cr)       fc1 1x1-conv weight, transposed
    # w2t_ref: (Cr, C)       fc2 1x1-conv weight, transposed
    # o_ref:   (bt, 1, C)    sigmoid(channel attention)
    # sum_acc, max_acc: (bt, C) fp32 running pooling accumulators
    k = pl.program_id(1)
    nk = pl.num_programs(1)
    thw = x_ref.shape[-1]

    @pl.when(k == 0)
    def _init():
        sum_acc[...] = jnp.zeros_like(sum_acc)
        max_acc[...] = jnp.full_like(max_acc, -jnp.inf)

    def _accumulate(x):
        # x: (bt, C, n) native dtype; fp32 sum accumulation, max then upcast.
        sum_acc[...] += jnp.sum(x, axis=-1, dtype=jnp.float32)
        max_acc[...] = jnp.maximum(max_acc[...],
                                   jnp.max(x, axis=-1).astype(jnp.float32))

    rem = hw % thw
    if rem == 0:
        # Every tile is full-width: no masking anywhere, single body.
        _accumulate(x_ref[...])
    else:
        # Only the last tile is ragged; gate so non-final tiles pay zero
        # masking cost.  The ragged tile uses a static sub-slice of the block
        # (no iota/compare/where, no extra full-tile temporaries).
        @pl.when(k < nk - 1)
        def _full_tile():
            _accumulate(x_ref[...])

        @pl.when(k == nk - 1)
        def _ragged_tile():
            _accumulate(x_ref[:, :, :rem])

    @pl.when(k == nk - 1)
    def _finalize():
        bt = sum_acc.shape[0]
        avg = sum_acc[...] * (1.0 / hw)                       # (bt, C) fp32
        mx = max_acc[...]                                     # (bt, C) fp32
        # Stack avg & max so the shared MLP runs once per batch tile; cast the
        # tiny activations to the weight dtype instead of upcasting weights.
        pooled = jnp.concatenate([avg, mx], axis=0).astype(w1t_ref.dtype)
        h = jnp.maximum(
            jnp.dot(pooled, w1t_ref[...],
                    preferred_element_type=jnp.float32), 0.0)          # (2bt, Cr)
        out = jnp.dot(h.astype(w2t_ref.dtype), w2t_ref[...],
                      preferred_element_type=jnp.float32)              # (2bt, C)
        logits = out[:bt, :] + out[bt:, :]                    # avg path + max path
        o_ref[...] = jax.nn.sigmoid(logits)[:, None, :].astype(o_ref.dtype)


def _choose_thw(C, HW, itemsize, budget):
    """Largest lane-aligned spatial tile whose (C, THW) slab fits the budget."""
    max_lanes = max(128, (budget // (C * itemsize)) // 128 * 128)
    if HW <= max_lanes:
        return HW          # single full-extent tile (block == full dim is legal)
    return max_lanes       # multiple of 128


def channel_attention(x, w1, w2, *, tile_budget_bytes=None):
    """x: (B, C, H, W) NCHW (as in PyTorch).
    w1: (C//ratio, C)  -- fc1 = Conv2d(C, C//ratio, 1, bias=False) weight, squeezed.
    w2: (C, C//ratio)  -- fc2 = Conv2d(C//ratio, C, 1, bias=False) weight, squeezed.
    Returns (B, C, 1, 1) sigmoid channel attention, matching the PyTorch module."""
    B, C, H, W = x.shape
    HW = H * W
    Cr = w1.shape[0]
    assert w1.shape == (Cr, C) and w2.shape == (C, Cr)

    budget, vmem_ceiling, split_batch = _tpu_params()
    if tile_budget_bytes is not None:
        budget = tile_budget_bytes

    itemsize = jnp.dtype(x.dtype).itemsize
    THW = _choose_thw(C, HW, itemsize, budget)
    per_batch_bytes = C * THW * itemsize
    bt = max(1, min(B, budget // per_batch_bytes))
    if split_batch and B >= 2:
        # Keep >= 2 batch blocks so megacore's second TensorCore gets work.
        bt = min(bt, pl.cdiv(B, 2))
    nb = pl.cdiv(B, bt)           # trailing batch block may be ragged
    nk = pl.cdiv(HW, THW)         # trailing spatial block may be ragged

    x_flat = x.reshape(B, C, HW)
    w1t = w1.T                    # (C, Cr)
    w2t = w2.T                    # (Cr, C)

    # VMEM actually resident: double-buffered x / weights / output + fp32 scratch.
    w_itemsize = jnp.dtype(w1.dtype).itemsize
    x_block_bytes = bt * C * THW * itemsize
    need = (2 * x_block_bytes
            + 2 * 2 * C * Cr * w_itemsize
            + 2 * bt * C * itemsize
            + 2 * bt * C * 4
            + (2 << 20))                      # slack for finalize temporaries
    vmem_limit = int(min(vmem_ceiling, max(16 << 20, need)))

    cost = pl.CostEstimate(
        flops=3 * B * C * HW + 8 * B * C * Cr,
        transcendentals=B * C,
        bytes_accessed=B * C * HW * itemsize
        + 2 * C * Cr * w_itemsize
        + B * C * itemsize,
    )

    kernel = functools.partial(channel_attention_kernel, hw=HW)

    # TODO(synk): for bf16 inputs on v7x the fp32 sum+max can become VALU-bound;
    # offloading the tile sum to the MXU needs C on lanes (NHWC-ish layout) to
    # avoid a per-tile transpose, so it is left on the VPU here.
    out = pl.pallas_call(
        kernel,
        out_shape=jax.ShapeDtypeStruct((B, 1, C), x.dtype),
        grid_spec=pltpu.PrefetchScalarGridSpec(
            num_scalar_prefetch=0,
            grid=(nb, nk),                      # spatial reduction axis innermost
            in_specs=[
                pl.BlockSpec((bt, C, THW), lambda b, k: (b, 0, k)),
                pl.BlockSpec((C, Cr), lambda b, k: (0, 0)),
                pl.BlockSpec((Cr, C), lambda b, k: (0, 0)),
            ],
            out_specs=pl.BlockSpec((bt, 1, C), lambda b, k: (b, 0, 0)),
            scratch_shapes=[
                pltpu.VMEM((bt, C), jnp.float32),   # running sum
                pltpu.VMEM((bt, C), jnp.float32),   # running max
            ],
        ),
        compiler_params=pltpu.CompilerParams(
            dimension_semantics=("parallel", "arbitrary"),
            vmem_limit_bytes=vmem_limit),
        cost_estimate=cost,
    )(x_flat, w1t, w2t)

    return out.reshape(B, C, 1, 1)


def _reference(x, w1, w2):
    # pure-JAX reference mirroring the PyTorch forward
    avg = jnp.mean(x, axis=(2, 3))                       # (B, C)
    mx = jnp.max(x, axis=(2, 3))                         # (B, C)

    def mlp(p):
        h = jnp.maximum(p @ w1.T, 0.0)                   # (B, C//r)
        return h @ w2.T                                  # (B, C)

    out = jax.nn.sigmoid(mlp(avg) + mlp(mx))
    return out.reshape(*out.shape, 1, 1)


if __name__ == "__main__":
    key = jax.random.PRNGKey(0)
    kx, k1, k2, kx2, kx3 = jax.random.split(key, 5)

    C, ratio = 64, 16
    Cr = C // ratio
    w1 = jax.random.normal(k1, (Cr, C), dtype=jnp.float32) * (1.0 / jnp.sqrt(C))
    w2 = jax.random.normal(k2, (C, Cr), dtype=jnp.float32) * (1.0 / jnp.sqrt(Cr))

    # ---- test 1: standard small shape (single spatial tile) ----
    x = jax.random.normal(kx, (2, C, 16, 16), dtype=jnp.float32)
    out = jax.block_until_ready(channel_attention(x, w1, w2))
    ref = _reference(x, w1, w2)
    assert out.shape == (2, C, 1, 1)
    assert jnp.allclose(out, ref, atol=1e-5, rtol=1e-5)

    # ---- test 2: tiny tile budget -> tiled + ragged spatial reduction
    #      (HW = 200 split into THW = 128 tiles, last tile uses static slice) ----
    x2 = jax.random.normal(kx2, (2, C, 10, 20), dtype=jnp.float32)
    out2 = jax.block_until_ready(
        channel_attention(x2, w1, w2, tile_budget_bytes=48 * 1024))
    ref2 = _reference(x2, w1, w2)
    assert out2.shape == (2, C, 1, 1)
    assert jnp.allclose(out2, ref2, atol=1e-5, rtol=1e-5)

    # ---- test 3: batch not a multiple of the batch tile (ragged batch block) ----
    x3 = jax.random.normal(kx3, (3, C, 16, 16), dtype=jnp.float32)
    out3 = jax.block_until_ready(
        channel_attention(x3, w1, w2, tile_budget_bytes=160 * 1024))
    ref3 = _reference(x3, w1, w2)
    assert out3.shape == (3, C, 1, 1)
    assert jnp.allclose(out3, ref3, atol=1e-5, rtol=1e-5)

    print("KERNEL_OK")
</pallas_src>

<mosaic_0001>
module attributes {stable_mosaic.version = 11 : i64} {
  func.func @channel_attention_kernel(%arg0: i32, %arg1: i32, %arg2: memref<2x64x256xf32, #tpu.memory_space<vmem>>, %arg3: memref<64x4xf32, #tpu.memory_space<vmem>>, %arg4: memref<4x64xf32, #tpu.memory_space<vmem>>, %arg5: memref<2x1x64xf32, #tpu.memory_space<vmem>>, %arg6: memref<2x64xf32, #tpu.memory_space<vmem>>, %arg7: memref<2x64xf32, #tpu.memory_space<vmem>>) attributes {dimension_semantics = [#tpu.dimension_semantics<parallel>, #tpu.dimension_semantics<arbitrary>], iteration_bounds = array<i64: 1, 1>, scalar_prefetch = 0 : i64, scratch_operands = 2 : i64, tpu.core_type = #tpu.core_type<tc>, window_params = [{transform_indices = @transform_0, window_bounds = array<i64: 2, 64, 256>}, {pipeline_mode = #tpu.pipeline_mode<synchronous>, transform_indices = @transform_1, window_bounds = array<i64: 64, 4>}, {pipeline_mode = #tpu.pipeline_mode<synchronous>, transform_indices = @transform_2, window_bounds = array<i64: 4, 64>}, {transform_indices = @transform_3, window_bounds = array<i64: 2, 1, 64>}]} {
    %c0_i32 = arith.constant 0 : i32
    %0 = arith.cmpi eq, %arg1, %c0_i32 : i32
    %1 = arith.extui %0 : i1 to i32
    %c0_i32_0 = arith.constant 0 : i32
    %2 = arith.cmpi ne, %1, %c0_i32_0 : i32
    scf.if %2 {
      %cst_14 = arith.constant 0.000000e+00 : f32
      %15 = vector.broadcast %cst_14 : f32 to vector<2x64xf32>
      %c0_15 = arith.constant 0 : index
      %c0_16 = arith.constant 0 : index
      %16 = vector.load %arg6[%c0_15, %c0_16] : memref<2x64xf32, #tpu.memory_space<vmem>>, vector<2x64xf32>
      tpu.vector_store %arg6[%c0_15, %c0_16], %15 {strides = array<i32>} : memref<2x64xf32, #tpu.memory_space<vmem>>, vector<2x64xf32>,
      %cst_17 = arith.constant 0xFF800000 : f32
      %17 = vector.broadcast %cst_17 : f32 to vector<2x64xf32>
      %c0_18 = arith.constant 0 : index
      %c0_19 = arith.constant 0 : index
      %18 = vector.load %arg7[%c0_18, %c0_19] : memref<2x64xf32, #tpu.memory_space<vmem>>, vector<2x64xf32>
      tpu.vector_store %arg7[%c0_18, %c0_19], %17 {strides = array<i32>} : memref<2x64xf32, #tpu.memory_space<vmem>>, vector<2x64xf32>,
    } else {
    }
    %c0 = arith.constant 0 : index
    %c0_1 = arith.constant 0 : index
    %c0_2 = arith.constant 0 : index
    %3 = vector.load %arg2[%c0, %c0_1, %c0_2] : memref<2x64x256xf32, #tpu.memory_space<vmem>>, vector<2x64x256xf32>
    %c0_3 = arith.constant 0 : index
    %c0_4 = arith.constant 0 : index
    %4 = vector.load %arg6[%c0_3, %c0_4] : memref<2x64xf32, #tpu.memory_space<vmem>>, vector<2x64xf32>
    %cst = arith.constant dense<0.000000e+00> : vector<2x64xf32>
    %5 = vector.multi_reduction <add>, %3, %cst [2] : vector<2x64x256xf32> to vector<2x64xf32>
    %6 = arith.addf %4, %5 : vector<2x64xf32>
    %c0_5 = arith.constant 0 : index
    %c0_6 = arith.constant 0 : index
    %7 = vector.load %arg6[%c0_5, %c0_6] : memref<2x64xf32, #tpu.memory_space<vmem>>, vector<2x64xf32>
    tpu.vector_store %arg6[%c0_5, %c0_6], %6 {strides = array<i32>} : memref<2x64xf32, #tpu.memory_space<vmem>>, vector<2x64xf32>,
    %c0_7 = arith.constant 0 : index
    %c0_8 = arith.constant 0 : index
    %8 = vector.load %arg7[%c0_7, %c0_8] : memref<2x64xf32, #tpu.memory_space<vmem>>, vector<2x64xf32>
    %cst_9 = arith.constant dense<0xFF800000> : vector<2x64xf32>
    %9 = vector.multi_reduction <maximumf>, %3, %cst_9 [2] : vector<2x64x256xf32> to vector<2x64xf32>
    %10 = arith.maximumf %8, %9 : vector<2x64xf32>
    %c0_10 = arith.constant 0 : index
    %c0_11 = arith.constant 0 : index
    %11 = vector.load %arg7[%c0_10, %c0_11] : memref<2x64xf32, #tpu.memory_space<vmem>>, vector<2x64xf32>
    tpu.vector_store %arg7[%c0_10, %c0_11], %10 {strides = array<i32>} : memref<2x64xf32, #tpu.memory_space<vmem>>, vector<2x64xf32>,
    %c0_i32_12 = arith.constant 0 : i32
    %12 = arith.cmpi eq, %arg1, %c0_i32_12 : i32
    %13 = arith.extui %12 : i1 to i32
    %c0_i32_13 = arith.constant 0 : i32
    %14 = arith.cmpi ne, %13, %c0_i32_13 : i32
    scf.if %14 {
      %c0_14 = arith.constant 0 : index
      %c0_15 = arith.constant 0 : index
      %15 = vector.load %arg6[%c0_14, %c0_15] : memref<2x64xf32, #tpu.memory_space<vmem>>, vector<2x64xf32>
      %cst_16 = arith.constant 3.906250e-03 : f32
      %16 = vector.broadcast %cst_16 : f32 to vector<2x64xf32>
      %17 = arith.mulf %15, %16 : vector<2x64xf32>
      %c0_17 = arith.constant 0 : index
      %c0_18 = arith.constant 0 : index
      %18 = vector.load %arg7[%c0_17, %c0_18] : memref<2x64xf32, #tpu.memory_space<vmem>>, vector<2x64xf32>
      %19 = tpu.concatenate %17, %18 in 0 : vector<2x64xf32>, vector<2x64xf32> -> vector<4x64xf32>
      %c0_19 = arith.constant 0 : index
      %c0_20 = arith.constant 0 : index
      %20 = vector.load %arg3[%c0_19, %c0_20] : memref<64x4xf32, #tpu.memory_space<vmem>>, vector<64x4xf32>
      %cst_21 = arith.constant dense<0.000000e+00> : vector<4x4xf32>
      %21 = tpu.matmul %19, %20, %cst_21 {dimension_numbers = #tpu.dot_dimension_numbers<[1], [0], [0], [1], [0, 0, 1, 1], [], []>} : vector<4x64xf32>, vector<64x4xf32>, vector<4x4xf32> -> vector<4x4xf32>
      %cst_22 = arith.constant 0.000000e+00 : f32
      %22 = vector.broadcast %cst_22 : f32 to vector<4x4xf32>
      %23 = arith.maximumf %21, %22 : vector<4x4xf32>
      %c0_23 = arith.constant 0 : index
      %c0_24 = arith.constant 0 : index
      %24 = vector.load %arg4[%c0_23, %c0_24] : memref<4x64xf32, #tpu.memory_space<vmem>>, vector<4x64xf32>
      %cst_25 = arith.constant dense<0.000000e+00> : vector<4x64xf32>
      %25 = tpu.matmul %23, %24, %cst_25 {dimension_numbers = #tpu.dot_dimension_numbers<[1], [0], [0], [1], [0, 0, 1, 1], [], []>} : vector<4x4xf32>, vector<4x64xf32>, vector<4x64xf32> -> vector<4x64xf32>
      %26 = vector.extract_strided_slice %25 {offsets = [0, 0], sizes = [2, 64], strides = [1, 1]} : vector<4x64xf32> to vector<2x64xf32>
      %27 = vector.extract_strided_slice %25 {offsets = [2, 0], sizes = [2, 64], strides = [1, 1]} : vector<4x64xf32> to vector<2x64xf32>
      %28 = arith.addf %26, %27 : vector<2x64xf32>
      %29 = arith.negf %28 : vector<2x64xf32>
      %30 = math.exp %29 : vector<2x64xf32>
      %cst_26 = arith.constant 1.000000e+00 : f32
      %31 = vector.broadcast %cst_26 : f32 to vector<2x64xf32>
      %32 = arith.addf %31, %30 : vector<2x64xf32>
      %33 = arith.divf %31, %32 : vector<2x64xf32>
      %34 = vector.shape_cast %33 : vector<2x64xf32> to vector<2x1x64xf32>
      %c0_27 = arith.constant 0 : index
      %c0_28 = arith.constant 0 : index
      %c0_29 = arith.constant 0 : index
      %35 = vector.load %arg5[%c0_27, %c0_28, %c0_29] : memref<2x1x64xf32, #tpu.memory_space<vmem>>, vector<2x1x64xf32>
      tpu.vector_store %arg5[%c0_27, %c0_28, %c0_29], %34 {strides = array<i32>} : memref<2x1x64xf32, #tpu.memory_space<vmem>>, vector<2x1x64xf32>,
    } else {
    }
    return
  }
  func.func @transform_0(%arg0: i32, %arg1: i32) -> (i32, i32, i32) {
    %c0_i32 = arith.constant 0 : i32
    %c0_i32_0 = arith.constant 0 : i32
    return %arg0, %c0_i32, %arg1 : i32, i32, i32
  }
  func.func @transform_1(%arg0: i32, %arg1: i32) -> (i32, i32) {
    %c0_i32 = arith.constant 0 : i32
    %c0_i32_0 = arith.constant 0 : i32
    %c0_i32_1 = arith.constant 0 : i32
    return %c0_i32, %c0_i32_0 : i32, i32
  }
  func.func @transform_2(%arg0: i32, %arg1: i32) -> (i32, i32) {
    %c0_i32 = arith.constant 0 : i32
    %c0_i32_0 = arith.constant 0 : i32
    %c0_i32_1 = arith.constant 0 : i32
    return %c0_i32, %c0_i32_0 : i32, i32
  }
  func.func @transform_3(%arg0: i32, %arg1: i32) -> (i32, i32, i32) {
    %c0_i32 = arith.constant 0 : i32
    %c0_i32_0 = arith.constant 0 : i32
    %c0_i32_1 = arith.constant 0 : i32
    return %arg0, %c0_i32, %c0_i32_0 : i32, i32, i32
  }
}

</mosaic_0001>

<llo_original>
// kernel: tpu_custom_call.1
$region0: #{tpu_custom_call.1}
  #allocation0 [shape = 'u32[]', space=smem, size = 0x4, offset = 0x4, fixed_abs, tag = 'smem constant byte address 0x4 - core index']
  #allocation1 [shape = 'u32[72,128]{1,0:T(1,128)}', space=vmem, size = 0x9000, scoped, tag = 'internal scratch']
  #allocation2 [shape = 'f32[2,64]{1,0:T(2,128)}', space=vmem, size = 0x400, scoped, tag = 'scratch operand']
  #allocation3 [shape = 'f32[2,64]{1,0:T(2,128)}', space=vmem, size = 0x400, scoped, tag = 'scratch operand']
  %s0 = inlined_call_operand.hbm [shape: f32[2,64,256], index: 0, kind: input, shape index: {}]
  %s1 = inlined_call_operand.vmem [shape: f32[64,4], index: 1, kind: input, shape index: {}]
  %s2 = inlined_call_operand.vmem [shape: f32[4,64], index: 2, kind: input, shape index: {}]
  %s3 = inlined_call_operand.hbm [shape: f32[2,1,64], index: 3, kind: output, shape index: {}]
  %s4 = sld [smem:[#allocation0]]
  $region34: #{tpu_custom_call.1} parent=0
    _
  %s6 = ssub.s32 1, %s4
  %s7 = scalar_select 0, %s6, %s4
  $region1: #{tpu_custom_call.1} parent=0
    #allocation4 [shape = 'u8[131072]{0}', space=vmem, size = 0x20000, scoped, tag = 'input window, operand 0, single buffered']
    #allocation5 [shape = 's32[1]{0}', space=sflag, size = 0x4, scoped, tag = 'scoped memory for tpu_custom_call.1']
    #allocation6 [shape = 's32[1]{0}', space=sflag, size = 0x4, scoped, tag = 'scoped memory for tpu_custom_call.1']
    #allocation7 [shape = 'u8[1024]{0}', space=vmem, size = 0x400, scoped, tag = 'output window, operand 0, single buffered']
    %8 = vsyncpa [#allocation5], 0
    %9 = vsyncpa [#allocation6], 0
    // Predicated region
    $region2: #{tpu_custom_call.1} parent=1 // pred_check
      _
    $region3: #{tpu_custom_call.1} parent=1 // pred_check_branch
      %11 = sbr.rel (0) target = $region5
    $region4: #{tpu_custom_call.1} parent=1 // pred_region
      %13 = vsyncadd [#allocation5], 0
      %s14 = sshll.u32 %s0, 4
      %s15 = int_to_ptr.hbm [resolvable:$true] %s14
      %s16 = sshll.u32 [#allocation4], 4
      %s17 = int_to_ptr.vmem [resolvable:$true] %s16
      %22 = dma.hbm_to_vmem [thread:$0]  %s15, 4096, %s17, [#allocation5], 256, 256, 16
    $region5: #{tpu_custom_call.1} parent=1 // pred_fallthru
      _
    // Predicated region
    $region6: #{tpu_custom_call.1} parent=1 // pred_check
      _
    $region7: #{tpu_custom_call.1} parent=1 // pred_check_branch
      %24 = sbr.rel (0) target = $region9
    $region8: #{tpu_custom_call.1} parent=1 // pred_region
      _
    $region9: #{tpu_custom_call.1} parent=1 // pred_fallthru
      _
    // Predicated region
    $region10: #{tpu_custom_call.1} parent=1 // pred_check
      _
    $region11: #{tpu_custom_call.1} parent=1 // pred_check_branch
      %26 = sbr.rel (0) target = $region13
    $region12: #{tpu_custom_call.1} parent=1 // pred_region
      _
    $region13: #{tpu_custom_call.1} parent=1 // pred_fallthru
      _
    // Predicated region
    $region14: #{tpu_custom_call.1} parent=1 // pred_check
      _
    $region15: #{tpu_custom_call.1} parent=1 // pred_check_branch
      %28 = sbr.rel (0) target = $region17
    $region16: #{tpu_custom_call.1} parent=1 // pred_region
      %30 = dma.done [#allocation5], 4096
    $region17: #{tpu_custom_call.1} parent=1 // pred_fallthru
      _
    %p31 = scmp.eq.s32.totalorder 0, 0
    // Predicated region
    $region18: #{tpu_custom_call.1} parent=1 // pred_check
      %p32 = pneg %p31
    $region19: #{tpu_custom_call.1} parent=1 // pred_check_branch
      %34 = sbr.rel (%p32) target = $region21
    $region20: #{tpu_custom_call.1} parent=1 // pred_region
      %vm35 = vcmask 517120
      %36 = vst.msk [vmem:[#allocation2] sm:$0x3] %vm35, 0.0
      %37 = vst.msk [vmem:[#allocation3] sm:$0x3] %vm35, -inf
    $region21: #{tpu_custom_call.1} parent=1 // pred_fallthru
      _
    %v38 = vld [vmem:[#allocation4] sm:$0xff]
    %v39 = vld [vmem:[#allocation4 + $0x8] sm:$0xff]
    %v40 = vld [vmem:[#allocation4 + $0x10] sm:$0xff]
    %v41 = vld [vmem:[#allocation4 + $0x18] sm:$0xff]
    %v42 = vld [vmem:[#allocation4 + $0x20] sm:$0xff]
    %v43 = vld [vmem:[#allocation4 + $0x28] sm:$0xff]
    %v44 = vld [vmem:[#allocation4 + $0x30] sm:$0xff]
    %v45 = vld [vmem:[#allocation4 + $0x38] sm:$0xff]
    %v46 = vld [vmem:[#allocation4 + $0x40] sm:$0xff]
    %v47 = vld [vmem:[#allocation4 + $0x48] sm:$0xff]
    %v48 = vld [vmem:[#allocation4 + $0x50] sm:$0xff]
    %v49 = vld [vmem:[#allocation4 + $0x58] sm:$0xff]
    %v50 = vld [vmem:[#allocation4 + $0x60] sm:$0xff]
    %v51 = vld [vmem:[#allocation4 + $0x68] sm:$0xff]
    %v52 = vld [vmem:[#allocation4 + $0x70] sm:$0xff]
    %v53 = vld [vmem:[#allocation4 + $0x78] sm:$0xff]
    %v54 = vld [vmem:[#allocation4 + $0x80] sm:$0xff]
    %v55 = vld [vmem:[#allocation4 + $0x88] sm:$0xff]
    %v56 = vld [vmem:[#allocation4 + $0x90] sm:$0xff]
    %v57 = vld [vmem:[#allocation4 + $0x98] sm:$0xff]
    %v58 = vld [vmem:[#allocation4 + $0xa0] sm:$0xff]
    %v59 = vld [vmem:[#allocation4 + $0xa8] sm:$0xff]
    %v60 = vld [vmem:[#allocation4 + $0xb0] sm:$0xff]
    %v61 = vld [vmem:[#allocation4 + $0xb8] sm:$0xff]
    %v62 = vld [vmem:[#allocation4 + $0xc0] sm:$0xff]
    %v63 = vld [vmem:[#allocation4 + $0xc8] sm:$0xff]
    %v64 = vld [vmem:[#allocation4 + $0xd0] sm:$0xff]
    %v65 = vld [vmem:[#allocation4 + $0xd8] sm:$0xff]
    %v66 = vld [vmem:[#allocation4 + $0xe0] sm:$0xff]
    %v67 = vld [vmem:[#allocation4 + $0xe8] sm:$0xff]
    %v68 = vld [vmem:[#allocation4 + $0xf0] sm:$0xff]
    %v69 = vld [vmem:[#allocation4 + $0xf8] sm:$0xff]
    %v70 = vld [vmem:[#allocation2] sm:$0x3]
    %v71 = vadd.f32 %v38, %v39
    %72 = vadd.xlane.f32.xlu0 %v71
    %v73 = vpop.xlane.xlu0 %72
    %v74 = vadd.f32 %v40, %v41
    %75 = vadd.xlane.f32.xlu0 %v74
    %v76 = vpop.xlane.xlu0 %75
    %v77 = vadd.f32 %v42, %v43
    %78 = vadd.xlane.f32.xlu0 %v77
    %v79 = vpop.xlane.xlu0 %78
    %v80 = vadd.f32 %v44, %v45
    %81 = vadd.xlane.f32.xlu0 %v80
    %v82 = vpop.xlane.xlu0 %81
    %v83 = vadd.f32 %v46, %v47
    %84 = vadd.xlane.f32.xlu0 %v83
    %v85 = vpop.xlane.xlu0 %84
    %v86 = vadd.f32 %v48, %v49
    %87 = vadd.xlane.f32.xlu0 %v86
    %v88 = vpop.xlane.xlu0 %87
    %v89 = vadd.f32 %v50, %v51
    %90 = vadd.xlane.f32.xlu0 %v89
    %v91 = vpop.xlane.xlu0 %90
    %v92 = vadd.f32 %v52, %v53
    %93 = vadd.xlane.f32.xlu0 %v92
    %v94 = vpop.xlane.xlu0 %93
    %v95 = vadd.f32 %v54, %v55
    %96 = vadd.xlane.f32.xlu0 %v95
    %v97 = vpop.xlane.xlu0 %96
    %v98 = vadd.f32 %v56, %v57
    %99 = vadd.xlane.f32.xlu0 %v98
    %v100 = vpop.xlane.xlu0 %99
    %v101 = vadd.f32 %v58, %v59
    %102 = vadd.xlane.f32.xlu0 %v101
    %v103 = vpop.xlane.xlu0 %102
    %v104 = vadd.f32 %v60, %v61
    %105 = vadd.xlane.f32.xlu0 %v104
    %v106 = vpop.xlane.xlu0 %105
    %v107 = vadd.f32 %v62, %v63
    %108 = vadd.xlane.f32.xlu0 %v107
    %v109 = vpop.xlane.xlu0 %108
    %v110 = vadd.f32 %v64, %v65
    %111 = vadd.xlane.f32.xlu0 %v110
    %v112 = vpop.xlane.xlu0 %111
    %v113 = vadd.f32 %v66, %v67
    %114 = vadd.xlane.f32.xlu0 %v113
    %v115 = vpop.xlane.xlu0 %114
    %v116 = vadd.f32 %v68, %v69
    %117 = vadd.xlane.f32.xlu0 %v116
    %v118 = vpop.xlane.xlu0 %117
    %v135 = vlaneseq
    %v136 = vand.u32 %v135, 127
    %v137 = vperm.slane %v73, %v136
    %v138 = vadd.s32 %v136, 4294967288
    %v139 = vperm.slane %v76, %v138
    %vm140 = vcmask 130112
    %v141 = vsel %vm140, %v139, %v137
    %v142 = vadd.s32 %v136, 4294967280
    %v143 = vperm.slane %v79, %v142
    %vm144 = vcmask 195712
    %v145 = vsel %vm144, %v143, %v141
    %v146 = vadd.s32 %v136, 4294967272
    %v147 = vperm.slane %v82, %v146
    %vm148 = vcmask 261312
    %v149 = vsel %vm148, %v147, %v145
    %v150 = vadd.s32 %v136, 4294967264
    %v151 = vperm.slane %v85, %v150
    %vm152 = vcmask 326912
    %v153 = vsel %vm152, %v151, %v149
    %v154 = vadd.s32 %v136, 4294967256
    %v155 = vperm.slane %v88, %v154
    %vm156 = vcmask 392512
    %v157 = vsel %vm156, %v155, %v153
    %v158 = vadd.s32 %v136, 4294967248
    %v159 = vperm.slane %v91, %v158
    %vm160 = vcmask 458112
    %v161 = vsel %vm160, %v159, %v157
    %v162 = vadd.s32 %v136, 4294967240
    %v163 = vperm.slane %v94, %v162
    %vm164 = vcmask 523712
    %v165 = vsel %vm164, %v163, %v161
    %v166 = vperm.slane %v97, %v136
    %v167 = vperm.slane %v100, %v138
    %v168 = vsel %vm140, %v167, %v166
    %v169 = vperm.slane %v103, %v142
    %v170 = vsel %vm144, %v169, %v168
    %v171 = vperm.slane %v106, %v146
    %v172 = vsel %vm148, %v171, %v170
    %v173 = vperm.slane %v109, %v150
    %v174 = vsel %vm152, %v173, %v172
    %v175 = vperm.slane %v112, %v154
    %v176 = vsel %vm156, %v175, %v174
    %v177 = vperm.slane %v115, %v158
    %v178 = vsel %vm160, %v177, %v176
    %v179 = vperm.slane %v118, %v162
    %v180 = vsel %vm164, %v179, %v178
    %vm181 = vcmask 1041409
    %v182 = vsel %vm181, %v180, %v165
    %v184 = vadd.f32 %v70, %v182
    %vm185 = vcmask 517120
    %186 = vst.msk [vmem:[#allocation2] sm:$0x3] %vm185, %v184
    %v187 = vld [vmem:[#allocation3] sm:$0x3]
    %v188 = vmax.f32 %v38, %v39
    %189 = vmax.xlane.f32.xlu0 %v188
    %v190 = vpop.xlane.xlu0 %189
    %v191 = vmax.f32 %v40, %v41
    %192 = vmax.xlane.f32.xlu0 %v191
    %v193 = vpop.xlane.xlu0 %192
    %v194 = vmax.f32 %v42, %v43
    %195 = vmax.xlane.f32.xlu0 %v194
    %v196 = vpop.xlane.xlu0 %195
    %v197 = vmax.f32 %v44, %v45
    %198 = vmax.xlane.f32.xlu0 %v197
    %v199 = vpop.xlane.xlu0 %198
    %v200 = vmax.f32 %v46, %v47
    %201 = vmax.xlane.f32.xlu0 %v200
    %v202 = vpop.xlane.xlu0 %201
    %v203 = vmax.f32 %v48, %v49
    %204 = vmax.xlane.f32.xlu0 %v203
    %v205 = vpop.xlane.xlu0 %204
    %v206 = vmax.f32 %v50, %v51
    %207 = vmax.xlane.f32.xlu0 %v206
    %v208 = vpop.xlane.xlu0 %207
    %v209 = vmax.f32 %v52, %v53
    %210 = vmax.xlane.f32.xlu0 %v209
    %v211 = vpop.xlane.xlu0 %210
    %v212 = vmax.f32 %v54, %v55
    %213 = vmax.xlane.f32.xlu0 %v212
    %v214 = vpop.xlane.xlu0 %213
    %v215 = vmax.f32 %v56, %v57
    %216 = vmax.xlane.f32.xlu0 %v215
    %v217 = vpop.xlane.xlu0 %216
    %v218 = vmax.f32 %v58, %v59
    %219 = vmax.xlane.f32.xlu0 %v218
    %v220 = vpop.xlane.xlu0 %219
    %v221 = vmax.f32 %v60, %v61
    %222 = vmax.xlane.f32.xlu0 %v221
    %v223 = vpop.xlane.xlu0 %222
    %v224 = vmax.f32 %v62, %v63
    %225 = vmax.xlane.f32.xlu0 %v224
    %v226 = vpop.xlane.xlu0 %225
    %v227 = vmax.f32 %v64, %v65
    %228 = vmax.xlane.f32.xlu0 %v227
    %v229 = vpop.xlane.xlu0 %228
    %v230 = vmax.f32 %v66, %v67
    %231 = vmax.xlane.f32.xlu0 %v230
    %v232 = vpop.xlane.xlu0 %231
    %v233 = vmax.f32 %v68, %v69
    %234 = vmax.xlane.f32.xlu0 %v233
    %v235 = vpop.xlane.xlu0 %234
    %v252 = vperm.slane %v190, %v136
    %v253 = vperm.slane %v193, %v138
    %v254 = vsel %vm140, %v253, %v252
    %v255 = vperm.slane %v196, %v142
    %v256 = vsel %vm144, %v255, %v254
    %v257 = vperm.slane %v199, %v146
    %v258 = vsel %vm148, %v257, %v256
    %v259 = vperm.slane %v202, %v150
    %v260 = vsel %vm152, %v259, %v258
    %v261 = vperm.slane %v205, %v154
    %v262 = vsel %vm156, %v261, %v260
    %v263 = vperm.slane %v208, %v158
    %v264 = vsel %vm160, %v263, %v262
    %v265 = vperm.slane %v211, %v162
    %v266 = vsel %vm164, %v265, %v264
    %v267 = vperm.slane %v214, %v136
    %v268 = vperm.slane %v217, %v138
    %v269 = vsel %vm140, %v268, %v267
    %v270 = vperm.slane %v220, %v142
    %v271 = vsel %vm144, %v270, %v269
    %v272 = vperm.slane %v223, %v146
    %v273 = vsel %vm148, %v272, %v271
    %v274 = vperm.slane %v226, %v150
    %v275 = vsel %vm152, %v274, %v273
    %v276 = vperm.slane %v229, %v154
    %v277 = vsel %vm156, %v276, %v275
    %v278 = vperm.slane %v232, %v158
    %v279 = vsel %vm160, %v278, %v277
    %v280 = vperm.slane %v235, %v162
    %v281 = vsel %vm164, %v280, %v279
    %v282 = vsel %vm181, %v281, %v266
    %v284 = vmax.f32 %v187, %v282
    %285 = vst.msk [vmem:[#allocation3] sm:$0x3] %vm185, %v284
    // Predicated region
    $region22: #{tpu_custom_call.1} parent=1 // pred_check
      %p286 = pneg %p31
    $region23: #{tpu_custom_call.1} parent=1 // pred_check_branch
      %288 = sbr.rel (%p286) target = $region25
    $region24: #{tpu_custom_call.1} parent=1 // pred_region
      %v289 = vld [vmem:[#allocation2] sm:$0x3]
      %v290 = vmul.f32 %v289, 0.00390625
      %v291 = vld [vmem:[#allocation3] sm:$0x3]
      %v293 = vrot.slane %v291, 6
      %vm295 = vcmask 1041408
      %v296 = vsel %vm295, %v290, %v293
      %v297 = vld [vmem:[%s1] sm:$0xff]
      %v298 = vld [vmem:[%s1 + $0x8] sm:$0xff]
      %v299 = vld [vmem:[%s1 + $0x10] sm:$0xff]
      %v300 = vld [vmem:[%s1 + $0x18] sm:$0xff]
      %v301 = vld [vmem:[%s1 + $0x20] sm:$0xff]
      %v302 = vld [vmem:[%s1 + $0x28] sm:$0xff]
      %v303 = vld [vmem:[%s1 + $0x30] sm:$0xff]
      %v304 = vld [vmem:[%s1 + $0x38] sm:$0xff]
      %vm305 = vcmask 523264
      %v307 = vsel %vm305, %v296, 0
      %309 = vmatpush.msra.mxu0 0.0
      %310 = vmatpush.msra.mxu0 0.0
      %311 = vmatpush.msra.mxu0 0.0
      %312 = vmatpush.msra.mxu0 0.0
      %313 = vmatpush.msra.mxu0 0.0
      %314 = vmatpush.msra.mxu0 0.0
      %315 = vmatpush.msra.mxu0 0.0
      %316 = vmatpush.msra.mxu0 0.0
      %317 = vmatpush.msra.mxu0 %v304
      %318 = vmatpush.msra.mxu0 %v303
      %319 = vmatpush.msra.mxu0 %v302
      %320 = vmatpush.msra.mxu0 %v301
      %321 = vmatpush.msra.mxu0 %v300
      %322 = vmatpush.msra.mxu0 %v299
      %323 = vmatpush.msra.mxu0 %v298
      %324 = vmatpush.msra.mxu0 %v297
      %325 = vmatmul.f32.gmra.mxu0 %v307
      %v326 = vpop.f32.mrf.mxu0
      %v327 = vadd.f32 0.0, %v326
      %328 = vdwg.mxu0
      %v329 = vmax.f32 %v327, 0.0
      %v330 = vld [vmem:[%s2] sm:$0xf]
      %vm331 = vcmask 31744
      %v333 = vsel %vm331, %v329, 0
      %vm335 = vcmask 1043456
      %v337 = vsel %vm335, %v330, 0
      %339 = vmatpush.msra.mxu0 0.0
      %340 = vmatpush.msra.mxu0 0.0
      %341 = vmatpush.msra.mxu0 0.0
      %342 = vmatpush.msra.mxu0 0.0
      %343 = vmatpush.msra.mxu0 0.0
      %344 = vmatpush.msra.mxu0 0.0
      %345 = vmatpush.msra.mxu0 0.0
      %346 = vmatpush.msra.mxu0 0.0
      %347 = vmatpush.msra.mxu0 0.0
      %348 = vmatpush.msra.mxu0 0.0
      %349 = vmatpush.msra.mxu0 0.0
      %350 = vmatpush.msra.mxu0 0.0
      %351 = vmatpush.msra.mxu0 0.0
      %352 = vmatpush.msra.mxu0 0.0
      %353 = vmatpush.msra.mxu0 0.0
      %354 = vmatpush.msra.mxu0 %v337
      %355 = vmatmul.f32.gmra.mxu0 %v333
      %v356 = vpop.f32.mrf.mxu0
      %v357 = vadd.f32 0.0, %v356
      %358 = vdwg.mxu0
      %v360 = vrot.slane %v357, 2
      %v362 = vadd.f32 %v357, %v360
      %v363 = vxor.u32 %v362, 2147483648
      %v364 = vmul.f32 %v363, 1.442695
      %v365 = vpow.pop %v364
      %v366 = vadd.f32 %v365, 1.0
      %v367 = vrcp.pop %v366
      %v368 = vmul.f32 %v366, %v367
      %v369 = vsub.f32 1.0, %v368
      %v370 = vmul.f32 %v367, %v369
      %v371 = vadd.f32 %v367, %v370
      %vm372 = vweird.f32 %v366
      %vm373 = vweird.f32 %v367
      %vm374 = vmor %vm372, %vm373
      %v375 = vsel %vm374, %v367, %v371
      %v376 = vand.u32 2147483647, %v366
      %vm377 = vcmp.eq.f32.partialorder %v376, 8.507059e+37
      %v378 = vand.u32 %v366, 2147483648
      %v379 = vor.u32 1.1754944e-38, %v378
      %v380 = vsel %vm377, %v379, %v375
      %v381 = vmul.f32 1.0, %v380
      %v383 = vrot.slane %v381, 1
      %vm385 = vcmask 516096
      %386 = vst.msk [vmem:[#allocation7] sm:$0x1] %vm385, %v381
      %387 = vst.msk [vmem:[#allocation7 + $0x1] sm:$0x1] %vm385, %v383
    $region25: #{tpu_custom_call.1} parent=1 // pred_fallthru
      _
    // Predicated region
    $region26: #{tpu_custom_call.1} parent=1 // pred_check
      _
    $region27: #{tpu_custom_call.1} parent=1 // pred_check_branch
      %389 = sbr.rel (0) target = $region29
    $region28: #{tpu_custom_call.1} parent=1 // pred_region
      %391 = vsyncadd [#allocation6], 0
      %s392 = sshll.u32 [#allocation7], 4
      %s393 = int_to_ptr.vmem [resolvable:$true] %s392
      %s394 = sshll.u32 %s3, 4
      %s395 = int_to_ptr.hbm [resolvable:$true] %s394
      %400 = dma.vmem_to_hbm [thread:$0]  %s393, 32, %s395, [#allocation6], 16, 16, 1
    $region29: #{tpu_custom_call.1} parent=1 // pred_fallthru
      _
    // Predicated region
    $region30: #{tpu_custom_call.1} parent=1 // pred_check
      _
    $region31: #{tpu_custom_call.1} parent=1 // pred_check_branch
      %402 = sbr.rel (0) target = $region33
    $region32: #{tpu_custom_call.1} parent=1 // pred_region
      %404 = dma.done [#allocation6], 32
    $region33: #{tpu_custom_call.1} parent=1 // pred_fallthru
      _
    %405 = vsyncpa [#allocation5], 1
    %406 = vsyncpa [#allocation6], 1

</llo_original>
